<compile_context>
chip_gen: v6e
topology: v6e:2x2x1
jax: 0.10.0
libtpu: 0.0.40
codegen_flags: <defaults>
</compile_context>

<pallas_src>
import functools

import jax
import jax.numpy as jnp
from jax.experimental import pallas as pl
from jax.experimental.pallas import tpu as pltpu


def attention_kernel(enc_ref, h_ref, out_ref, m_ref, l_ref, acc_ref,
                     *, seq_len, block_s):
    """One (batch b, seq-tile s) grid step of online-softmax attention.

    enc_ref: (1, block_s, D) tile of encoder outputs for batch b
    h_ref:   (1, 1, D)       last-layer decoder hidden state for batch b
    out_ref: (1, 1, D)       context vector for batch b (written on last tile)
    m/l/acc: VMEM scratch carrying online-softmax state across seq tiles
    """
    s_tile = pl.program_id(1)

    @pl.when(s_tile == 0)
    def _init():
        m_ref[...] = jnp.full_like(m_ref, -jnp.inf)
        l_ref[...] = jnp.zeros_like(l_ref)
        acc_ref[...] = jnp.zeros_like(acc_ref)

    e = enc_ref[0]                    # (block_s, D), already f32 -- no cast
    hv = h_ref[0]                     # (1, D)

    # scores[s] = <enc[s, :], h>   (lane reduction over D)
    scores = jnp.sum(e * hv, axis=-1, keepdims=True)          # (block_s, 1)

    if seq_len % block_s != 0:
        # Mask the ragged tail tile (boundary-block padding is undefined).
        pos = s_tile * block_s + jax.lax.broadcasted_iota(
            jnp.int32, (block_s, 1), 0)
        valid = pos < seq_len
        scores = jnp.where(valid, scores, -jnp.inf)
        e = jnp.where(valid, e, 0.0)

    # Online softmax: accumulate an unnormalized context, normalize once.
    m_prev = m_ref[...]                                        # (1, 1)
    m_new = jnp.maximum(m_prev, jnp.max(scores, axis=0, keepdims=True))
    alpha = jnp.exp(m_prev - m_new)                            # (1, 1)
    p = jnp.exp(scores - m_new)                                # (block_s, 1)
    l_ref[...] = alpha * l_ref[...] + jnp.sum(p, axis=0, keepdims=True)
    acc_ref[...] = alpha * acc_ref[...] + jnp.sum(p * e, axis=0, keepdims=True)
    m_ref[...] = m_new

    @pl.when(s_tile == pl.num_programs(1) - 1)
    def _finalize():
        inv_l = pl.reciprocal(l_ref[...], approx=True)         # EUP, ~free
        out_ref[0] = (acc_ref[...] * inv_l).astype(out_ref.dtype)


def attention(enc_seq, h, *, block_s=None):
    """enc_seq: (S, B, D), h: (L, B, D) -> (B, D). Matches the PyTorch module."""
    h_last = h[-1]                                  # (B, D): last GRU layer
    S, B, D = enc_seq.shape

    # Layout plumbing outside the kernel: batch-major, D on the lane axis.
    enc_bsd = jnp.transpose(enc_seq, (1, 0, 2))     # (B, S, D)
    h3 = h_last.reshape(B, 1, D)                    # (B, 1, D)

    if block_s is None:
        # Whole sequence in one tile when small; otherwise pipeline 512-row
        # tiles over the reduction axis (512*D*4B double-buffered stays well
        # under the default scoped-VMEM limit on v5e/v6e/v7x).
        block_s = S if S <= 512 else 512

    grid = (B, pl.cdiv(S, block_s))
    kernel = functools.partial(attention_kernel, seq_len=S, block_s=block_s)

    out = pl.pallas_call(
        kernel,
        out_shape=jax.ShapeDtypeStruct((B, 1, D), enc_seq.dtype),
        grid=grid,
        in_specs=[
            pl.BlockSpec((1, block_s, D), lambda b, s: (b, s, 0)),
            pl.BlockSpec((1, 1, D), lambda b, s: (b, 0, 0)),
        ],
        out_specs=pl.BlockSpec((1, 1, D), lambda b, s: (b, 0, 0)),
        scratch_shapes=[
            pltpu.VMEM((1, 1), jnp.float32),   # m: running max
            pltpu.VMEM((1, 1), jnp.float32),   # l: running softmax denom
            pltpu.VMEM((1, D), jnp.float32),   # acc: unnormalized context
        ],
        compiler_params=pltpu.CompilerParams(
            dimension_semantics=("parallel", "arbitrary")),
    )(enc_bsd, h3)
    return out.reshape(B, D)


def attention_ref(enc_seq, h):
    # pure-JAX reference mirroring the PyTorch forward
    h_last = h[-1]                                           # (B, D)
    scores = jnp.einsum("sbd,bd->bs", enc_seq, h_last)       # (B, S)
    weights = jax.nn.softmax(scores, axis=1)                 # (B, S)
    return jnp.sum(enc_seq * weights.T[:, :, None], axis=0)  # (B, D)


if __name__ == "__main__":
    # Small shapes implied by the forward: seq=8, batch=2, enc_dim=dec_dim=32,
    # 2 GRU layers stacked in h.
    S, B, D, L = 8, 2, 32, 2
    key = jax.random.PRNGKey(0)
    k_enc, k_h = jax.random.split(key)
    enc_seq = jax.random.normal(k_enc, (S, B, D), dtype=jnp.float32)
    h = jax.random.normal(k_h, (L, B, D), dtype=jnp.float32)

    out = attention(enc_seq, h)
    jax.block_until_ready(out)

    ref = attention_ref(enc_seq, h)
    assert out.shape == (B, D)
    # Tolerance accounts for the intentionally approximate EUP reciprocal
    # used to normalize the context (pl.reciprocal(..., approx=True)).
    assert jnp.allclose(out, ref, atol=1e-2, rtol=1e-2), \
        float(jnp.max(jnp.abs(out - ref)))

    print("KERNEL_OK")
</pallas_src>

<mosaic_0001>
module attributes {stable_mosaic.version = 11 : i64} {
  func.func @attention_kernel(%arg0: i32, %arg1: i32, %arg2: memref<1x8x32xf32, #tpu.memory_space<vmem>>, %arg3: memref<1x1x32xf32, #tpu.memory_space<vmem>>, %arg4: memref<1x1x32xf32, #tpu.memory_space<vmem>>, %arg5: memref<1x1xf32, #tpu.memory_space<vmem>>, %arg6: memref<1x1xf32, #tpu.memory_space<vmem>>, %arg7: memref<1x32xf32, #tpu.memory_space<vmem>>) attributes {dimension_semantics = [#tpu.dimension_semantics<parallel>, #tpu.dimension_semantics<arbitrary>], iteration_bounds = array<i64: 2, 1>, scalar_prefetch = 0 : i64, scratch_operands = 3 : i64, tpu.core_type = #tpu.core_type<tc>, window_params = [{transform_indices = @transform_0, window_bounds = array<i64: 1, 8, 32>}, {transform_indices = @transform_1, window_bounds = array<i64: 1, 1, 32>}, {transform_indices = @transform_2, window_bounds = array<i64: 1, 1, 32>}]} {
    %c0_i32 = arith.constant 0 : i32
    %0 = arith.cmpi eq, %arg1, %c0_i32 : i32
    %1 = arith.extui %0 : i1 to i32
    %c0_i32_0 = arith.constant 0 : i32
    %2 = arith.cmpi ne, %1, %c0_i32_0 : i32
    scf.if %2 {
      %cst_23 = arith.constant 0xFF800000 : f32
      %39 = vector.broadcast %cst_23 : f32 to vector<1x1xf32>
      %c0_24 = arith.constant 0 : index
      %c0_25 = arith.constant 0 : index
      %40 = vector.load %arg5[%c0_24, %c0_25] : memref<1x1xf32, #tpu.memory_space<vmem>>, vector<1x1xf32>
      tpu.vector_store %arg5[%c0_24, %c0_25], %39 {strides = array<i32>} : memref<1x1xf32, #tpu.memory_space<vmem>>, vector<1x1xf32>,
      %cst_26 = arith.constant 0.000000e+00 : f32
      %41 = vector.broadcast %cst_26 : f32 to vector<1x1xf32>
      %c0_27 = arith.constant 0 : index
      %c0_28 = arith.constant 0 : index
      %42 = vector.load %arg6[%c0_27, %c0_28] : memref<1x1xf32, #tpu.memory_space<vmem>>, vector<1x1xf32>
      tpu.vector_store %arg6[%c0_27, %c0_28], %41 {strides = array<i32>} : memref<1x1xf32, #tpu.memory_space<vmem>>, vector<1x1xf32>,
      %cst_29 = arith.constant 0.000000e+00 : f32
      %43 = vector.broadcast %cst_29 : f32 to vector<1x32xf32>
      %c0_30 = arith.constant 0 : index
      %c0_31 = arith.constant 0 : index
      %44 = vector.load %arg7[%c0_30, %c0_31] : memref<1x32xf32, #tpu.memory_space<vmem>>, vector<1x32xf32>
      tpu.vector_store %arg7[%c0_30, %c0_31], %43 {strides = array<i32>} : memref<1x32xf32, #tpu.memory_space<vmem>>, vector<1x32xf32>,
    } else {
    }
    %c0 = arith.constant 0 : index
    %c0_1 = arith.constant 0 : index
    %c0_2 = arith.constant 0 : index
    %3 = vector.load %arg2[%c0, %c0_1, %c0_2] : memref<1x8x32xf32, #tpu.memory_space<vmem>>, vector<1x8x32xf32>
    %4 = vector.shape_cast %3 : vector<1x8x32xf32> to vector<8x32xf32>
    %c0_3 = arith.constant 0 : index
    %c0_4 = arith.constant 0 : index
    %c0_5 = arith.constant 0 : index
    %5 = vector.load %arg3[%c0_3, %c0_4, %c0_5] : memref<1x1x32xf32, #tpu.memory_space<vmem>>, vector<1x1x32xf32>
    %6 = vector.shape_cast %5 : vector<1x1x32xf32> to vector<1x32xf32>
    %7 = vector.broadcast %6 : vector<1x32xf32> to vector<8x32xf32>
    %8 = arith.mulf %4, %7 : vector<8x32xf32>
    %cst = arith.constant dense<0.000000e+00> : vector<8xf32>
    %9 = vector.multi_reduction <add>, %8, %cst [1] : vector<8x32xf32> to vector<8xf32>
    %10 = vector.shape_cast %9 : vector<8xf32> to vector<8x1xf32>
    %c0_6 = arith.constant 0 : index
    %c0_7 = arith.constant 0 : index
    %11 = vector.load %arg5[%c0_6, %c0_7] : memref<1x1xf32, #tpu.memory_space<vmem>>, vector<1x1xf32>
    %cst_8 = arith.constant dense<0xFF800000> : vector<1xf32>
    %12 = vector.multi_reduction <maximumf>, %10, %cst_8 [0] : vector<8x1xf32> to vector<1xf32>
    %13 = vector.shape_cast %12 : vector<1xf32> to vector<1x1xf32>
    %14 = arith.maximumf %11, %13 : vector<1x1xf32>
    %15 = arith.subf %11, %14 : vector<1x1xf32>
    %16 = math.exp %15 : vector<1x1xf32>
    %17 = vector.broadcast %14 : vector<1x1xf32> to vector<8x1xf32>
    %18 = arith.subf %10, %17 : vector<8x1xf32>
    %19 = math.exp %18 : vector<8x1xf32>
    %c0_9 = arith.constant 0 : index
    %c0_10 = arith.constant 0 : index
    %20 = vector.load %arg6[%c0_9, %c0_10] : memref<1x1xf32, #tpu.memory_space<vmem>>, vector<1x1xf32>
    %21 = arith.mulf %16, %20 : vector<1x1xf32>
    %cst_11 = arith.constant dense<0.000000e+00> : vector<1xf32>
    %22 = vector.multi_reduction <add>, %19, %cst_11 [0] : vector<8x1xf32> to vector<1xf32>
    %23 = vector.shape_cast %22 : vector<1xf32> to vector<1x1xf32>
    %24 = arith.addf %21, %23 : vector<1x1xf32>
    %c0_12 = arith.constant 0 : index
    %c0_13 = arith.constant 0 : index
    %25 = vector.load %arg6[%c0_12, %c0_13] : memref<1x1xf32, #tpu.memory_space<vmem>>, vector<1x1xf32>
    tpu.vector_store %arg6[%c0_12, %c0_13], %24 {strides = array<i32>} : memref<1x1xf32, #tpu.memory_space<vmem>>, vector<1x1xf32>,
    %c0_14 = arith.constant 0 : index
    %c0_15 = arith.constant 0 : index
    %26 = vector.load %arg7[%c0_14, %c0_15] : memref<1x32xf32, #tpu.memory_space<vmem>>, vector<1x32xf32>
    %27 = vector.broadcast %16 : vector<1x1xf32> to vector<1x32xf32>
    %28 = arith.mulf %27, %26 : vector<1x32xf32>
    %29 = vector.broadcast %19 : vector<8x1xf32> to vector<8x32xf32>
    %30 = arith.mulf %29, %4 : vector<8x32xf32>
    %cst_16 = arith.constant dense<0.000000e+00> : vector<32xf32>
    %31 = vector.multi_reduction <add>, %30, %cst_16 [0] : vector<8x32xf32> to vector<32xf32>
    %32 = vector.shape_cast %31 : vector<32xf32> to vector<1x32xf32>
    %33 = arith.addf %28, %32 : vector<1x32xf32>
    %c0_17 = arith.constant 0 : index
    %c0_18 = arith.constant 0 : index
    %34 = vector.load %arg7[%c0_17, %c0_18] : memref<1x32xf32, #tpu.memory_space<vmem>>, vector<1x32xf32>
    tpu.vector_store %arg7[%c0_17, %c0_18], %33 {strides = array<i32>} : memref<1x32xf32, #tpu.memory_space<vmem>>, vector<1x32xf32>,
    %c0_19 = arith.constant 0 : index
    %c0_20 = arith.constant 0 : index
    %35 = vector.load %arg5[%c0_19, %c0_20] : memref<1x1xf32, #tpu.memory_space<vmem>>, vector<1x1xf32>
    tpu.vector_store %arg5[%c0_19, %c0_20], %14 {strides = array<i32>} : memref<1x1xf32, #tpu.memory_space<vmem>>, vector<1x1xf32>,
    %c0_i32_21 = arith.constant 0 : i32
    %36 = arith.cmpi eq, %arg1, %c0_i32_21 : i32
    %37 = arith.extui %36 : i1 to i32
    %c0_i32_22 = arith.constant 0 : i32
    %38 = arith.cmpi ne, %37, %c0_i32_22 : i32
    scf.if %38 {
      %c0_23 = arith.constant 0 : index
      %c0_24 = arith.constant 0 : index
      %39 = vector.load %arg6[%c0_23, %c0_24] : memref<1x1xf32, #tpu.memory_space<vmem>>, vector<1x1xf32>
      %40 = tpu.reciprocal %39 {approx = true} : vector<1x1xf32> -> vector<1x1xf32>
      %c0_25 = arith.constant 0 : index
      %c0_26 = arith.constant 0 : index
      %41 = vector.load %arg7[%c0_25, %c0_26] : memref<1x32xf32, #tpu.memory_space<vmem>>, vector<1x32xf32>
      %42 = vector.broadcast %40 : vector<1x1xf32> to vector<1x32xf32>
      %43 = arith.mulf %41, %42 : vector<1x32xf32>
      %c0_27 = arith.constant 0 : index
      %c0_28 = arith.constant 0 : index
      %c0_29 = arith.constant 0 : index
      %44 = vector.load %arg4[%c0_27, %c0_28, %c0_29] : memref<1x1x32xf32, #tpu.memory_space<vmem>>, vector<1x1x32xf32>
      %45 = vector.shape_cast %44 : vector<1x1x32xf32> to vector<1x32xf32>
      %46 = vector.shape_cast %43 : vector<1x32xf32> to vector<1x1x32xf32>
      tpu.vector_store %arg4[%c0_27, %c0_28, %c0_29], %46 {strides = array<i32>} : memref<1x1x32xf32, #tpu.memory_space<vmem>>, vector<1x1x32xf32>,
    } else {
    }
    return
  }
  func.func @transform_0(%arg0: i32, %arg1: i32) -> (i32, i32, i32) {
    %c0_i32 = arith.constant 0 : i32
    %c0_i32_0 = arith.constant 0 : i32
    return %arg0, %arg1, %c0_i32 : i32, i32, i32
  }
  func.func @transform_1(%arg0: i32, %arg1: i32) -> (i32, i32, i32) {
    %c0_i32 = arith.constant 0 : i32
    %c0_i32_0 = arith.constant 0 : i32
    %c0_i32_1 = arith.constant 0 : i32
    return %arg0, %c0_i32, %c0_i32_0 : i32, i32, i32
  }
  func.func @transform_2(%arg0: i32, %arg1: i32) -> (i32, i32, i32) {
    %c0_i32 = arith.constant 0 : i32
    %c0_i32_0 = arith.constant 0 : i32
    %c0_i32_1 = arith.constant 0 : i32
    return %arg0, %c0_i32, %c0_i32_0 : i32, i32, i32
  }
}

</mosaic_0001>

<llo_original>
// kernel: tpu_custom_call.1
$region0: #{tpu_custom_call.1}
  #allocation0 [shape = 'u32[]', space=smem, size = 0x4, offset = 0x4, fixed_abs, tag = 'smem constant byte address 0x4 - core index']
  #allocation1 [shape = 'u32[144,128]{1,0:T(1,128)}', space=vmem, size = 0x12000, scoped, tag = 'internal scratch']
  #allocation2 [shape = 'f32[1,1]{1,0:T(1,128)}', space=vmem, size = 0x200, scoped, tag = 'scratch operand']
  #allocation3 [shape = 'f32[1,1]{1,0:T(1,128)}', space=vmem, size = 0x200, scoped, tag = 'scratch operand']
  #allocation4 [shape = 'f32[1,32]{1,0:T(1,128)}', space=vmem, size = 0x200, scoped, tag = 'scratch operand']
  %s0 = inlined_call_operand.hbm [shape: f32[2,8,32], index: 0, kind: input, shape index: {}]
  %s1 = inlined_call_operand.hbm [shape: f32[2,1,32], index: 1, kind: input, shape index: {}]
  %s2 = inlined_call_operand.hbm [shape: f32[2,1,32], index: 2, kind: output, shape index: {}]
  %s3 = sld [smem:[#allocation0]]
  $region57: #{tpu_custom_call.1} parent=0
    _
  %s5 = ssub.s32 1, %s3
  %s6 = scalar_select 0, %s5, %s3
  $region1: #{tpu_custom_call.1} parent=0
    #allocation5 [shape = 'u8[8192]{0}', space=vmem, size = 0x2000, scoped, tag = 'input window, operand 0']
    #allocation6 [shape = 's32[2]{0}', space=sflag, size = 0x8, scoped, tag = 'scoped memory for tpu_custom_call.1']
    #allocation7 [shape = 's32[2]{0}', space=sflag, size = 0x8, scoped, tag = 'scoped memory for tpu_custom_call.1']
    #allocation8 [shape = 'u8[1024]{0}', space=vmem, size = 0x400, scoped, tag = 'input window, operand 1']
    #allocation9 [shape = 's32[2]{0}', space=sflag, size = 0x8, scoped, tag = 'scoped memory for tpu_custom_call.1']
    #allocation10 [shape = 'u8[1024]{0}', space=vmem, size = 0x400, scoped, tag = 'output window, operand 0']
    %7 = vsyncpa [#allocation6], 0
    %s8 = scalar_lea.sflag [#allocation6], 1
    %9 = vsyncpa %s8, 0
    %10 = vsyncpa [#allocation9], 0
    %s11 = scalar_lea.sflag [#allocation9], 1
    %12 = vsyncpa %s11, 0
    %13 = vsyncpa [#allocation7], 0
    %s14 = scalar_lea.sflag [#allocation7], 1
    %15 = vsyncpa %s14, 0
    loop: start=0, step=1, limit=4
    $region2: #{tpu_custom_call.1} parent=1 // loop_pre_header
      _
    $region3: #{tpu_custom_call.1} parent=1 // loop_header
      %s17 = sphi 0, %s21
      %p18 = scmp.ge.s32.totalorder %s17, 4
      %s24 = sphi 0, %s36
      %s25 = sphi 0, %s32
      %s26 = sphi 0, %s24
      %s27 = sphi 0, %s25
      %s28 = sphi 0, %s26
      %s29 = sphi 0, %s27
      %s41 = sphi 0, %s43
      %s44 = sphi 0, %s41
      %s45 = sphi 0, %s44
      %s61 = sphi 0, %s45
      %s67 = sphi 0, %s69
      %s70 = sphi 0, %s67
      %s71 = sphi 0, %s70
      %s87 = sphi 0, %s71
      %s93 = sphi 0, %s95
      %s96 = sphi 0, %s93
      %s97 = sphi 0, %s96
      %s113 = sphi 0, %s97
    $region4: #{tpu_custom_call.1} parent=1 // loop_header_branch
      %20 = sbr.rel (%p18) target = $region8
    $region5: #{tpu_custom_call.1} parent=1 // loop_body
      %s22 = ssub.s32 %s17, 1
      %s23 = ssub.s32 %s17, 2
      %s30 = sadd.s32 1, %s25
      %p31 = scmp.ge.s32.totalorder %s30, 1
      %s32 = scalar_select %p31, 0, %s30
      %s33 = sadd.s32 1, %s24
      %s34 = scalar_select %p31, %s33, %s24
      %p35 = scmp.ge.s32.totalorder %s34, 2
      %s36 = scalar_select %p35, 0, %s34
      %s37 = ssub.s32 %s24, %s36
      %s38 = ssub.s32 %s25, %s32
      %s39 = sor.u32 %s37, %s38
      %p40 = scmp.eq.s32.totalorder %s39, 0
      %s42 = sadd.s32 %s41, 1
      %s43 = scalar_select %p40, %s41, %s42
      %p46 = pneg %p40
      %p47 = scmp.eq.s32.totalorder %s17, 1
      %p48 = por %p46, %p47
      %p49 = scmp.ne.s32.totalorder %s41, %s44
      %p50 = scmp.eq.s32.totalorder %s17, 0
      %p51 = por %p49, %p50
      %p52 = scmp.ne.s32.totalorder %s41, %s44
      %p53 = scmp.eq.s32.totalorder %s22, 1
      %p54 = por %p52, %p53
      %p55 = scmp.ne.s32.totalorder %s44, %s45
      %p56 = scmp.eq.s32.totalorder %s22, 0
      %p57 = por %p55, %p56
      %p58 = scmp.ne.s32.totalorder %s44, %s45
      %p59 = scmp.eq.s32.totalorder %s23, 1
      %p60 = por %p58, %p59
      %p62 = scmp.ne.s32.totalorder %s45, %s61
      %p63 = scmp.eq.s32.totalorder %s23, 0
      %p64 = por %p62, %p63
      %s65 = ssub.s32 %s24, %s36
      %p66 = scmp.eq.s32.totalorder %s65, 0
      %s68 = sadd.s32 %s67, 1
      %s69 = scalar_select %p66, %s67, %s68
      %p72 = pneg %p66
      %p73 = scmp.eq.s32.totalorder %s17, 1
      %p74 = por %p72, %p73
      %p75 = scmp.ne.s32.totalorder %s67, %s70
      %p76 = scmp.eq.s32.totalorder %s17, 0
      %p77 = por %p75, %p76
      %p78 = scmp.ne.s32.totalorder %s67, %s70
      %p79 = scmp.eq.s32.totalorder %s22, 1
      %p80 = por %p78, %p79
      %p81 = scmp.ne.s32.totalorder %s70, %s71
      %p82 = scmp.eq.s32.totalorder %s22, 0
      %p83 = por %p81, %p82
      %p84 = scmp.ne.s32.totalorder %s70, %s71
      %p85 = scmp.eq.s32.totalorder %s23, 1
      %p86 = por %p84, %p85
      %p88 = scmp.ne.s32.totalorder %s71, %s87
      %p89 = scmp.eq.s32.totalorder %s23, 0
      %p90 = por %p88, %p89
      %s91 = ssub.s32 %s24, %s36
      %p92 = scmp.eq.s32.totalorder %s91, 0
      %s94 = sadd.s32 %s93, 1
      %s95 = scalar_select %p92, %s93, %s94
      %p98 = pneg %p92
      %p99 = scmp.eq.s32.totalorder %s17, 1
      %p100 = por %p98, %p99
      %p101 = scmp.ne.s32.totalorder %s93, %s96
      %p102 = scmp.eq.s32.totalorder %s17, 0
      %p103 = por %p101, %p102
      %p104 = scmp.ne.s32.totalorder %s93, %s96
      %p105 = scmp.eq.s32.totalorder %s22, 1
      %p106 = por %p104, %p105
      %p107 = scmp.ne.s32.totalorder %s96, %s97
      %p108 = scmp.eq.s32.totalorder %s22, 0
      %p109 = por %p107, %p108
      %p110 = scmp.ne.s32.totalorder %s96, %s97
      %p111 = scmp.eq.s32.totalorder %s23, 1
      %p112 = por %p110, %p111
      %p114 = scmp.ne.s32.totalorder %s97, %s113
      %p115 = scmp.eq.s32.totalorder %s23, 0
      %p116 = por %p114, %p115
      %p117 = scmp.le.s32.totalorder 1, %s17
      %p118 = scmp.lt.s32.totalorder %s17, 3
      %p119 = pnand %p117, %p118
      %p120 = pneg %p119
      // Predicated region
      $region9: #{tpu_custom_call.1} parent=5 // pred_check
        _
      $region10: #{tpu_custom_call.1} parent=5 // pred_check_branch
        %122 = sbr.rel (%p119) target = $region12
      $region11: #{tpu_custom_call.1} parent=5 // pred_region
        %s123 = ssub.s32 %s17, 1
      $region12: #{tpu_custom_call.1} parent=5 // pred_fallthru
        _
      %p124 = scmp.lt.s32.totalorder %s17, 2
      // Predicated region
      $region13: #{tpu_custom_call.1} parent=5 // pred_check
        %p125 = pneg %p124
      $region14: #{tpu_custom_call.1} parent=5 // pred_check_branch
        %127 = sbr.rel (%p125) target = $region16
      $region15: #{tpu_custom_call.1} parent=5 // pred_region
        // Predicated region
        $region17: #{tpu_custom_call.1} parent=15 // pred_check
          %p128 = pneg %p51
        $region18: #{tpu_custom_call.1} parent=15 // pred_check_branch
          %130 = sbr.rel (%p128) target = $region20
        $region19: #{tpu_custom_call.1} parent=15 // pred_region
          %s131 = sand.u32 %s41, 1
          %s132 = scalar_lea.sflag [#allocation6], %s131
          %s133 = sand.u32 %s41, 1
          %s134 = smul.addr %s133, 8
          %s135 = scalar_lea.vmem [#allocation5], %s134
          %s137 = ssub.s32 128, 128
          %138 = vsyncadd %s132, %s137
          %s139 = sadd.s32 %s25, %s24
          %s140 = smul.addr %s139, 128
          %s141 = scalar_lea.hbm %s0, %s140
          %s143 = sshll.u32 %s135, 4
          %s144 = int_to_ptr.vmem [resolvable:$true] %s143
          %146 = dma.hbm_to_vmem [thread:$0]  %s141, 128, %s144, %s132
        $region20: #{tpu_custom_call.1} parent=15 // pred_fallthru
          _
        // Predicated region
        $region21: #{tpu_custom_call.1} parent=15 // pred_check
          %p147 = pneg %p77
        $region22: #{tpu_custom_call.1} parent=15 // pred_check_branch
          %149 = sbr.rel (%p147) target = $region24
        $region23: #{tpu_custom_call.1} parent=15 // pred_region
          %s150 = sand.u32 %s67, 1
          %s151 = scalar_lea.sflag [#allocation9], %s150
          %s152 = sand.u32 %s67, 1
          %s153 = scalar_lea.vmem [#allocation8], %s152
          %s155 = ssub.s32 16, 16
          %156 = vsyncadd %s151, %s155
          %s157 = smul.addr %s24, 16
          %s158 = scalar_lea.hbm %s1, %s157
          %s160 = sshll.u32 %s153, 4
          %s161 = int_to_ptr.vmem [resolvable:$true] %s160
          %163 = dma.hbm_to_vmem [thread:$0]  %s158, 16, %s161, %s151
        $region24: #{tpu_custom_call.1} parent=15 // pred_fallthru
          _
      $region16: #{tpu_custom_call.1} parent=5 // pred_fallthru
        _
      %p164 = scmp.le.s32.totalorder 1, %s17
      %p165 = scmp.lt.s32.totalorder %s17, 3
      %p166 = pnand %p164, %p165
      %p167 = pneg %p166
      // Predicated region
      $region25: #{tpu_custom_call.1} parent=5 // pred_check
        _
      $region26: #{tpu_custom_call.1} parent=5 // pred_check_branch
        %169 = sbr.rel (%p166) target = $region28
      $region27: #{tpu_custom_call.1} parent=5 // pred_region
        %s170 = ssub.s32 %s17, 1
        %s171 = sand.u32 %s44, 1
        %s172 = scalar_lea.sflag [#allocation6], %s171
        %s173 = sand.u32 %s44, 1
        %s174 = smul.addr %s173, 8
        %s175 = scalar_lea.vmem [#allocation5], %s174
        // Predicated region
        $region29: #{tpu_custom_call.1} parent=27 // pred_check
          %p176 = pneg %p57
        $region30: #{tpu_custom_call.1} parent=27 // pred_check_branch
          %178 = sbr.rel (%p176) target = $region32
        $region31: #{tpu_custom_call.1} parent=27 // pred_region
          %179 = dma.done %s172, 128
        $region32: #{tpu_custom_call.1} parent=27 // pred_fallthru
          _
        %s180 = sand.u32 %s70, 1
        %s181 = scalar_lea.sflag [#allocation9], %s180
        %s182 = sand.u32 %s70, 1
        %s183 = scalar_lea.vmem [#allocation8], %s182
        // Predicated region
        $region33: #{tpu_custom_call.1} parent=27 // pred_check
          %p184 = pneg %p83
        $region34: #{tpu_custom_call.1} parent=27 // pred_check_branch
          %186 = sbr.rel (%p184) target = $region36
        $region35: #{tpu_custom_call.1} parent=27 // pred_region
          %187 = dma.done %s181, 16
        $region36: #{tpu_custom_call.1} parent=27 // pred_fallthru
          _
        %s188 = sand.u32 %s44, 1
        %s189 = scalar_lea.sflag [#allocation6], %s188
        %s190 = sand.u32 %s44, 1
        %s191 = smul.addr %s190, 8
        %s192 = scalar_lea.vmem [#allocation5], %s191
        %p193 = pneg %p57
        %p194 = pneg %p54
        %s195 = sand.u32 %s70, 1
        %s196 = scalar_lea.sflag [#allocation9], %s195
        %s197 = sand.u32 %s70, 1
        %s198 = scalar_lea.vmem [#allocation8], %s197
        %p199 = pneg %p83
        %p200 = pneg %p80
        %p201 = pneg %p109
        %p202 = pneg %p106
        %s203 = sand.u32 %s96, 1
        %s204 = scalar_lea.sflag [#allocation7], %s203
        %s205 = sand.u32 %s96, 1
        %s206 = scalar_lea.vmem [#allocation10], %s205
        %p207 = scmp.eq.s32.totalorder %s27, 0
        // Predicated region
        $region37: #{tpu_custom_call.1} parent=27 // pred_check
          %p208 = pneg %p207
        $region38: #{tpu_custom_call.1} parent=27 // pred_check_branch
          %210 = sbr.rel (%p208) target = $region40
        $region39: #{tpu_custom_call.1} parent=27 // pred_region
          %vm211 = vcmask 0
          %212 = vst.msk [vmem:[#allocation2] sm:$0x1] %vm211, -inf
          %213 = vst.msk [vmem:[#allocation3] sm:$0x1] %vm211, 0.0
          %vm214 = vcmask 253952
          %215 = vst.msk [vmem:[#allocation4] sm:$0x1] %vm214, 0.0
        $region40: #{tpu_custom_call.1} parent=27 // pred_fallthru
          _
        %v216 = vld [vmem:[%s175] sm:$0xff]
        %v217 = vld [vmem:[%s183] sm:$0x1]
        %v219 = vlaneseq
        %v220 = vshrl.u32 %v219, 7
        %v221 = vsub.s32 0, %v220
        %v222 = vrot.slane %v217, %v221
        %v224 = vmul.f32 %v216, %v222
        %vm225 = vcmask 261120
        %v226 = vsel %vm225, %v224, 0.0
        %227 = vadd.xlane.f32.xlu0 %v226
        %v228 = vpop.xlane.xlu0 %227
        %v229 = vld [vmem:[#allocation2] sm:$0x1]
        %v230 = vrot.slane %v228, 4
        %v231 = vmax.f32 %v228, %v230
        %v232 = vrot.slane %v231, 2
        %v233 = vmax.f32 %v231, %v232
        %v234 = vrot.slane %v233, 1
        %v235 = vmax.f32 %v233, %v234
        %v236 = vmax.f32 %v229, %v235
        %v237 = vsub.f32 %v229, %v236
        %v238 = vmul.f32 %v237, 1.442695
        %v239 = vpow.pop %v238
        %v241 = vlaneseq
        %v242 = vshrl.u32 %v241, 7
        %v243 = vsub.s32 0, %v242
        %v244 = vrot.slane %v236, %v243
        %v246 = vsub.f32 %v228, %v244
        %v247 = vmul.f32 %v246, 1.442695
        %v248 = vpow.pop %v247
        %v249 = vld [vmem:[#allocation3] sm:$0x1]
        %v250 = vmul.f32 %v239, %v249
        %vm251 = vcmask 7168
        %v252 = vsel %vm251, %v248, 0.0
        %v253 = vrot.slane %v252, 4
        %v254 = vadd.f32 %v252, %v253
        %v255 = vrot.slane %v254, 2
        %v256 = vadd.f32 %v254, %v255
        %v257 = vrot.slane %v256, 1
        %v258 = vadd.f32 %v256, %v257
        %v259 = vadd.f32 %v250, %v258
        %vm260 = vcmask 0
        %261 = vst.msk [vmem:[#allocation3] sm:$0x1] %vm260, %v259
        %v262 = vld [vmem:[#allocation4] sm:$0x1]
        %264 = vset.pattern.permute.xlu0 0
        %265 = vperm.xlu0 %264, %v239
        %v266 = vpop.permute.xlu0 %265
        %v268 = vlaneseq
        %v269 = vshrl.u32 %v268, 7
        %v270 = vsub.s32 0, %v269
        %v271 = vrot.slane %v266, %v270
        %v272 = vmul.f32 %v271, %v262
        %274 = vset.pattern.permute.xlu0 0
        %275 = vperm.xlu0 %274, %v248
        %v276 = vpop.permute.xlu0 %275
        %v278 = vmul.f32 %v276, %v216
        %v279 = vsel %vm225, %v278, 0.0
        %v280 = vrot.slane %v279, 4
        %v281 = vadd.f32 %v279, %v280
        %v282 = vrot.slane %v281, 2
        %v283 = vadd.f32 %v281, %v282
        %v284 = vrot.slane %v283, 1
        %v285 = vadd.f32 %v283, %v284
        %v286 = vadd.f32 %v272, %v285
        %vm287 = vcmask 253952
        %288 = vst.msk [vmem:[#allocation4] sm:$0x1] %vm287, %v286
        %289 = vst.msk [vmem:[#allocation2] sm:$0x1] %vm260, %v236
        // Predicated region
        $region41: #{tpu_custom_call.1} parent=27 // pred_check
          %p290 = pneg %p207
        $region42: #{tpu_custom_call.1} parent=27 // pred_check_branch
          %292 = sbr.rel (%p290) target = $region44
        $region43: #{tpu_custom_call.1} parent=27 // pred_region
          %v293 = vld [vmem:[#allocation3] sm:$0x1]
          %v294 = vrcp.pop %v293
          %v295 = vld [vmem:[#allocation4] sm:$0x1]
          %297 = vset.pattern.permute.xlu0 0
          %298 = vperm.xlu0 %297, %v294
          %v299 = vpop.permute.xlu0 %298
          %v301 = vlaneseq
          %v302 = vshrl.u32 %v301, 7
          %v303 = vsub.s32 0, %v302
          %v304 = vrot.slane %v299, %v303
          %v305 = vmul.f32 %v295, %v304
          %306 = vst.msk [vmem:[%s206] sm:$0x1] %vm287, %v305
        $region44: #{tpu_custom_call.1} parent=27 // pred_fallthru
          _
        %s307 = sand.u32 %s96, 1
        %s308 = scalar_lea.sflag [#allocation7], %s307
        %s309 = sand.u32 %s96, 1
        %s310 = scalar_lea.vmem [#allocation10], %s309
        // Predicated region
        $region45: #{tpu_custom_call.1} parent=27 // pred_check
          %p311 = pneg %p106
        $region46: #{tpu_custom_call.1} parent=27 // pred_check_branch
          %313 = sbr.rel (%p311) target = $region48
        $region47: #{tpu_custom_call.1} parent=27 // pred_region
          %s315 = ssub.s32 16, 16
          %316 = vsyncadd %s308, %s315
          %s317 = smul.addr %s26, 16
          %s318 = scalar_lea.hbm %s2, %s317
          %s320 = sshll.u32 %s310, 4
          %s321 = int_to_ptr.vmem [resolvable:$true] %s320
          %323 = dma.vmem_to_hbm [thread:$0]  %s321, 16, %s318, %s308
        $region48: #{tpu_custom_call.1} parent=27 // pred_fallthru
          _
      $region28: #{tpu_custom_call.1} parent=5 // pred_fallthru
        _
      %p324 = scmp.le.s32.totalorder 2, %s17
      // Predicated region
      $region49: #{tpu_custom_call.1} parent=5 // pred_check
        %p325 = pneg %p324
      $region50: #{tpu_custom_call.1} parent=5 // pred_check_branch
        %327 = sbr.rel (%p325) target = $region52
      $region51: #{tpu_custom_call.1} parent=5 // pred_region
        %s328 = ssub.s32 %s17, 2
        // Predicated region
        $region53: #{tpu_custom_call.1} parent=51 // pred_check
          %p329 = pneg %p112
        $region54: #{tpu_custom_call.1} parent=51 // pred_check_branch
          %331 = sbr.rel (%p329) target = $region56
        $region55: #{tpu_custom_call.1} parent=51 // pred_region
          %s332 = sand.u32 %s97, 1
          %s333 = scalar_lea.sflag [#allocation7], %s332
          %s334 = sand.u32 %s97, 1
          %s335 = scalar_lea.vmem [#allocation10], %s334
          %336 = dma.done %s333, 16
        $region56: #{tpu_custom_call.1} parent=51 // pred_fallthru
          _
      $region52: #{tpu_custom_call.1} parent=5 // pred_fallthru
        _
    $region6: #{tpu_custom_call.1} parent=1 // loop_footer
      %s21 = sadd.s32 1, %s17
    $region7: #{tpu_custom_call.1} parent=1 // loop_footer_branch
      %16 = sbr.rel target = $region3
    $region8: #{tpu_custom_call.1} parent=1 // loop_exit
      _
    %337 = vsyncpa [#allocation6], 1
    %s338 = scalar_lea.sflag [#allocation6], 1
    %339 = vsyncpa %s338, 1
    %340 = vsyncpa [#allocation9], 1
    %s341 = scalar_lea.sflag [#allocation9], 1
    %342 = vsyncpa %s341, 1
    %343 = vsyncpa [#allocation7], 1
    %s344 = scalar_lea.sflag [#allocation7], 1
    %345 = vsyncpa %s344, 1

</llo_original>
